<compile_context>
chip_gen: v7x
topology: tpu7x:2x2x1
jax: 0.10.0
libtpu: 0.0.40
codegen_flags: <defaults>
</compile_context>

<pallas_src>
import functools
import math

import jax
import jax.numpy as jnp
from jax.experimental import pallas as pl
from jax.experimental.pallas import tpu as pltpu


def _round_up(x, m):
    return (x + m - 1) // m * m


def _cdiv(a, b):
    return -(-a // b)


def _vmem_capacity_bytes():
    try:
        cap = int(pltpu.get_tpu_info().vmem_capacity_bytes)
        if cap > 0:
            return cap
    except Exception:
        pass
    return 64 * 1024 * 1024  # conservative default = v7x per-TensorCore VMEM


# ---------------------------------------------------------------------------
# Resident path: VMEM-resident table, vocab-chunked one-hot MXU gather.
# ---------------------------------------------------------------------------
def _resident_kernel(scale, v_chunk, n_chunks, ids_ref, table_ref, out_ref, acc_ref):
    # ids_ref:   (T, 1) int32 token ids of this block
    # table_ref: (V_pad, E) table, VMEM-resident across all grid steps
    # out_ref:   (T, E) output slab
    # acc_ref:   (T, E) f32 accumulator scratch
    ids = ids_ref[...]                                   # (T, 1)
    T = out_ref.shape[0]
    acc_ref[...] = jnp.zeros_like(acc_ref)

    def body(c, carry):
        start = pl.multiple_of(c * v_chunk, v_chunk)
        rows = table_ref[pl.ds(start, v_chunk), :]                        # (Vc, E)
        col = jax.lax.broadcasted_iota(jnp.int32, (T, v_chunk), 1) + start
        one_hot = (ids == col).astype(table_ref.dtype)                    # (T, Vc)
        acc_ref[...] += jnp.dot(one_hot, rows,
                                preferred_element_type=jnp.float32)
        return carry

    jax.lax.fori_loop(0, n_chunks, body, 0)
    out_ref[...] = (acc_ref[...] * scale).astype(out_ref.dtype)
    # TODO(synk): for f32 tables with very large V, add a direct row-copy
    # gather from the resident table (vld/vst only) and pick per shape.


def _resident_call(ids_col, table, scale, T, v_chunk, n_chunks, vmem_limit,
                   single_buffer_table):
    n_pad, _ = ids_col.shape
    V_pad, E = table.shape
    if single_buffer_table:
        # Constant index_map -> table never re-fetched; 1 buffer halves its footprint.
        table_spec = pl.BlockSpec((V_pad, E), lambda i: (0, 0),
                                  pipeline_mode=pl.Buffered(1))
    else:
        table_spec = pl.BlockSpec((V_pad, E), lambda i: (0, 0))
    return pl.pallas_call(
        functools.partial(_resident_kernel, scale, v_chunk, n_chunks),
        grid=(n_pad // T,),
        in_specs=[
            pl.BlockSpec((T, 1), lambda i: (i, 0)),      # this block's token ids
            table_spec,                                  # table resident across steps
        ],
        out_specs=pl.BlockSpec((T, E), lambda i: (i, 0)),
        out_shape=jax.ShapeDtypeStruct((n_pad, E), table.dtype),
        scratch_shapes=[pltpu.VMEM((T, E), jnp.float32)],
        compiler_params=pltpu.CompilerParams(
            dimension_semantics=("parallel",),           # token blocks are independent
            vmem_limit_bytes=int(vmem_limit),
        ),
    )(ids_col, table)


def _token_embedding_resident(flat_ids, emb_table, scale, T, v_chunk, n_chunks,
                              vmem_limit, single_buffer_table):
    n_tok = flat_ids.shape[0]
    V, E = emb_table.shape
    V_pad = n_chunks * v_chunk
    if V_pad != V:
        emb_table = jnp.pad(emb_table, ((0, V_pad - V), (0, 0)))
    n_pad = _round_up(n_tok, T)
    if n_pad != n_tok:
        flat_ids = jnp.pad(flat_ids, (0, n_pad - n_tok))   # pad with valid id 0
    ids_col = flat_ids.reshape(n_pad, 1)
    out = _resident_call(ids_col, emb_table, scale, T, v_chunk, n_chunks,
                         vmem_limit, single_buffer_table)
    return out[:n_tok]


# ---------------------------------------------------------------------------
# Fallback path: batched manual DMA gather from an HBM-resident table.
# ---------------------------------------------------------------------------
def _gather_kernel(scale, rows_per_step, ids_ref, table_hbm, out_ref, row_buf, sems):
    # ids_ref:   (n_tok_chunk,) int32 in SMEM (scalar prefetch)
    # table_hbm: (V, E) table left in HBM (memory_space=pl.ANY)
    # out_ref:   (R, E) dense output slab
    # row_buf:   (R, E) VMEM scratch, sems: (R,) DMA semaphores
    base = pl.program_id(0) * rows_per_step
    copies = []
    for r in range(rows_per_step):               # static unroll: R concurrent row DMAs
        tid = ids_ref[base + r]
        cp = pltpu.make_async_copy(table_hbm.at[pl.ds(tid, 1), :],
                                   row_buf.at[pl.ds(r, 1), :],
                                   sems.at[r])
        cp.start()
        copies.append(cp)
    for cp in copies:
        cp.wait()
    out_ref[...] = (row_buf[...].astype(jnp.float32) * scale).astype(out_ref.dtype)


def _rowgather_call(flat_ids, emb_table, scale, rows_per_step):
    n_tok = flat_ids.shape[0]
    V, E = emb_table.shape
    n_pad = _round_up(n_tok, rows_per_step)
    if n_pad != n_tok:
        flat_ids = jnp.pad(flat_ids, (0, n_pad - n_tok))   # pad with valid id 0

    grid_spec = pltpu.PrefetchScalarGridSpec(
        num_scalar_prefetch=1,
        grid=(n_pad // rows_per_step,),
        in_specs=[pl.BlockSpec(memory_space=pl.ANY)],        # table stays in HBM
        out_specs=pl.BlockSpec((rows_per_step, E), lambda i, ids: (i, 0)),
        scratch_shapes=[
            pltpu.VMEM((rows_per_step, E), emb_table.dtype),
            pltpu.SemaphoreType.DMA((rows_per_step,)),
        ],
    )
    out = pl.pallas_call(
        functools.partial(_gather_kernel, scale, rows_per_step),
        grid_spec=grid_spec,
        out_shape=jax.ShapeDtypeStruct((n_pad, E), emb_table.dtype),
        compiler_params=pltpu.CompilerParams(
            dimension_semantics=("parallel",),   # blocks independent; v7x TCs split them
            vmem_limit_bytes=32 * 1024 * 1024,
        ),
    )(flat_ids, emb_table)
    return out[:n_tok]


# Bound the padded SMEM scalar prefetch (1-D arrays pad to next_pow2(4N) bytes).
_MAX_TOKENS_PER_GATHER_CALL = 32768


def _token_embedding_rowgather(flat_ids, emb_table, scale, rows_per_step=8):
    n_tok = flat_ids.shape[0]
    outs = []
    for s in range(0, n_tok, _MAX_TOKENS_PER_GATHER_CALL):
        outs.append(_rowgather_call(flat_ids[s:s + _MAX_TOKENS_PER_GATHER_CALL],
                                    emb_table, scale, rows_per_step))
    if len(outs) == 1:
        return outs[0]
    return jnp.concatenate(outs, axis=0)


# ---------------------------------------------------------------------------
# Public wrapper (matches TokenEmbedding.forward semantics).
# ---------------------------------------------------------------------------
def token_embedding(tokens, emb_table, *, block_tokens=None):
    """tokens: (B, S) int; emb_table: (V, E) -> (B, S, E) = table[tokens] * sqrt(E)."""
    B, S = tokens.shape
    V, E = emb_table.shape
    n_tok = B * S
    scale = math.sqrt(E)
    itemsize = emb_table.dtype.itemsize
    flat_ids = jnp.clip(tokens.reshape(n_tok).astype(jnp.int32), 0, V - 1)

    # ---- plan the resident path ------------------------------------------
    target_chunk = 1024
    n_chunks = max(1, _cdiv(V, target_chunk))
    v_chunk = _round_up(_cdiv(V, n_chunks), 8)
    V_pad = n_chunks * v_chunk
    table_bytes = V_pad * E * itemsize

    vmem_cap = _vmem_capacity_bytes()
    # Generation-aware scoped-VMEM budget (~108 MiB on v5e/v6e, ~54 MiB on v7x).
    vmem_limit = min(int(vmem_cap * 0.85), 112 * 1024 * 1024)

    def budget_bytes(T, table_buffers):
        return (table_buffers * table_bytes
                + 2 * T * E * itemsize                  # double-buffered (T, E) out blocks
                + 2 * T * 4                             # double-buffered (T, 1) id blocks
                + T * E * 4                             # f32 accumulator scratch
                + T * v_chunk * (4 + itemsize)          # chunk one-hot + cast copy
                + (2 << 20))                            # compiler temps / headroom

    n_tok8 = _round_up(max(n_tok, 1), 8)
    T = None
    for cand in (1024, 512, 256, 128, 64, 32, 16, 8):
        if cand > n_tok8:
            continue
        if budget_bytes(cand, 1) <= vmem_limit:
            T = cand
            break
    if T is not None and block_tokens is not None:
        T = min(T, max(8, _round_up(block_tokens, 8)))

    # ---- choose path by rough HBM-traffic / MXU cost ----------------------
    use_resident = False
    if T is not None:
        row_bytes = E * itemsize
        hbm_bw = 8.0e11
        mxu = 8.0e14 if itemsize <= 2 else 2.0e14       # f32 MXU is multi-pass
        step_ovh = 0.35e-6
        resident_cost = (table_bytes / hbm_bw           # stream the table once
                         + 2.0 * n_tok * V_pad * E / mxu
                         + n_tok * row_bytes / hbm_bw
                         + _cdiv(n_tok, T) * step_ovh)
        gather_cost = (n_tok * row_bytes / (0.25 * hbm_bw)   # small per-row DMAs
                       + n_tok * row_bytes / hbm_bw
                       + _cdiv(n_tok, 8) * step_ovh)
        use_resident = resident_cost <= gather_cost

    out_flat = None
    if use_resident:
        try:
            out_flat = _token_embedding_resident(
                flat_ids, emb_table, scale, T, v_chunk, n_chunks, vmem_limit,
                single_buffer_table=True)
        except Exception:
            # pl.Buffered(1) not supported by this JAX build: retry with the
            # default double-buffered resident table if it still fits.
            if budget_bytes(T, 2) <= vmem_limit:
                try:
                    out_flat = _token_embedding_resident(
                        flat_ids, emb_table, scale, T, v_chunk, n_chunks,
                        vmem_limit, single_buffer_table=False)
                except Exception:
                    out_flat = None
    if out_flat is None:
        out_flat = _token_embedding_rowgather(flat_ids, emb_table, scale)

    return out_flat.reshape(B, S, E)


if __name__ == "__main__":
    # Small shapes consistent with the module's forward.
    vocab_size = 64
    emb_size = 128
    batch, seq = 2, 8

    key = jax.random.PRNGKey(0)
    k_emb, k_tok = jax.random.split(key)

    # nn.Embedding default init: N(0, 1)
    emb_table = jax.random.normal(k_emb, (vocab_size, emb_size), dtype=jnp.float32)
    tokens = jax.random.randint(k_tok, (batch, seq), 0, vocab_size, dtype=jnp.int32)

    ref = emb_table[tokens] * math.sqrt(emb_size)

    # Dispatching entry point (resident one-hot MXU path for this shape).
    out = jax.block_until_ready(token_embedding(tokens, emb_table))
    assert out.shape == (batch, seq, emb_size)
    assert out.dtype == jnp.float32
    assert jnp.allclose(out, ref, atol=1e-5, rtol=1e-5)

    # Also exercise the HBM DMA-gather fallback path explicitly.
    flat = tokens.reshape(-1).astype(jnp.int32)
    out_gather = jax.block_until_ready(
        _token_embedding_rowgather(flat, emb_table, math.sqrt(emb_size)))
    assert jnp.allclose(out_gather.reshape(batch, seq, emb_size), ref,
                        atol=1e-5, rtol=1e-5)

    print("KERNEL_OK")
</pallas_src>

<mosaic_0001>
module attributes {stable_mosaic.version = 11 : i64} {
  func.func @_resident_kernel(%arg0: i32, %arg1: memref<16x1xi32, #tpu.memory_space<vmem>>, %arg2: memref<64x128xf32, #tpu.memory_space<vmem>>, %arg3: memref<16x128xf32, #tpu.memory_space<vmem>>, %arg4: memref<16x128xf32, #tpu.memory_space<vmem>>) attributes {dimension_semantics = [#tpu.dimension_semantics<parallel>], iteration_bounds = array<i64: 1>, scalar_prefetch = 0 : i64, scratch_operands = 1 : i64, tpu.core_type = #tpu.core_type<tc>, window_params = [{transform_indices = @transform_0, window_bounds = array<i64: 16, 1>}, {pipeline_mode = #tpu.pipeline_mode<synchronous>, transform_indices = @transform_1, window_bounds = array<i64: 64, 128>}, {transform_indices = @transform_2, window_bounds = array<i64: 16, 128>}]} {
    %c0 = arith.constant 0 : index
    %c0_0 = arith.constant 0 : index
    %0 = vector.load %arg1[%c0, %c0_0] : memref<16x1xi32, #tpu.memory_space<vmem>>, vector<16x1xi32>
    %cst = arith.constant 0.000000e+00 : f32
    %1 = vector.broadcast %cst : f32 to vector<16x128xf32>
    %c0_1 = arith.constant 0 : index
    %c0_2 = arith.constant 0 : index
    %2 = vector.load %arg4[%c0_1, %c0_2] : memref<16x128xf32, #tpu.memory_space<vmem>>, vector<16x128xf32>
    tpu.vector_store %arg4[%c0_1, %c0_2], %1 {strides = array<i32>} : memref<16x128xf32, #tpu.memory_space<vmem>>, vector<16x128xf32>,
    %c0_i32 = arith.constant 0 : i32
    %c64_i32 = arith.constant 64 : i32
    %3 = arith.muli %c0_i32, %c64_i32 : i32
    %4 = tpu.assume_multiple %3, 64 : i32
    %5 = arith.index_cast %4 : i32 to index
    %c0_3 = arith.constant 0 : index
    %6 = vector.load %arg2[%5, %c0_3] : memref<64x128xf32, #tpu.memory_space<vmem>>, vector<64x128xf32>
    %7 = tpu.iota {dimensions = array<i32: 1>} : vector<16x64xi32>
    %8 = vector.broadcast %4 : i32 to vector<16x64xi32>
    %9 = arith.addi %7, %8 : vector<16x64xi32>
    %10 = vector.broadcast %0 : vector<16x1xi32> to vector<16x64xi32>
    %11 = arith.cmpi eq, %10, %9 : vector<16x64xi32>
    %12 = arith.extui %11 : vector<16x64xi1> to vector<16x64xi32>
    %13 = arith.sitofp %12 : vector<16x64xi32> to vector<16x64xf32>
    %c0_4 = arith.constant 0 : index
    %c0_5 = arith.constant 0 : index
    %14 = vector.load %arg4[%c0_4, %c0_5] : memref<16x128xf32, #tpu.memory_space<vmem>>, vector<16x128xf32>
    %cst_6 = arith.constant dense<0.000000e+00> : vector<16x128xf32>
    %15 = tpu.matmul %13, %6, %cst_6 {dimension_numbers = #tpu.dot_dimension_numbers<[1], [0], [0], [1], [0, 0, 1, 1], [], []>} : vector<16x64xf32>, vector<64x128xf32>, vector<16x128xf32> -> vector<16x128xf32>
    %16 = arith.addf %14, %15 : vector<16x128xf32>
    %c0_7 = arith.constant 0 : index
    %c0_8 = arith.constant 0 : index
    %17 = vector.load %arg4[%c0_7, %c0_8] : memref<16x128xf32, #tpu.memory_space<vmem>>, vector<16x128xf32>
    tpu.vector_store %arg4[%c0_7, %c0_8], %16 {strides = array<i32>} : memref<16x128xf32, #tpu.memory_space<vmem>>, vector<16x128xf32>,
    %c1_i32 = arith.constant 1 : i32
    %c0_9 = arith.constant 0 : index
    %c0_10 = arith.constant 0 : index
    %18 = vector.load %arg4[%c0_9, %c0_10] : memref<16x128xf32, #tpu.memory_space<vmem>>, vector<16x128xf32>
    %cst_11 = arith.constant 11.3137083 : f32
    %19 = vector.broadcast %cst_11 : f32 to vector<16x128xf32>
    %20 = arith.mulf %18, %19 : vector<16x128xf32>
    %c0_12 = arith.constant 0 : index
    %c0_13 = arith.constant 0 : index
    %21 = vector.load %arg3[%c0_12, %c0_13] : memref<16x128xf32, #tpu.memory_space<vmem>>, vector<16x128xf32>
    tpu.vector_store %arg3[%c0_12, %c0_13], %20 {strides = array<i32>} : memref<16x128xf32, #tpu.memory_space<vmem>>, vector<16x128xf32>,
    return
  }
  func.func @transform_0(%arg0: i32) -> (i32, i32) {
    %c0_i32 = arith.constant 0 : i32
    %c0_i32_0 = arith.constant 0 : i32
    return %arg0, %c0_i32 : i32, i32
  }
  func.func @transform_1(%arg0: i32) -> (i32, i32) {
    %c0_i32 = arith.constant 0 : i32
    %c0_i32_0 = arith.constant 0 : i32
    %c0_i32_1 = arith.constant 0 : i32
    return %c0_i32, %c0_i32_0 : i32, i32
  }
  func.func @transform_2(%arg0: i32) -> (i32, i32) {
    %c0_i32 = arith.constant 0 : i32
    %c0_i32_0 = arith.constant 0 : i32
    return %arg0, %c0_i32 : i32, i32
  }
}

module attributes {stable_mosaic.version = 11 : i64} {
  func.func @_resident_kernel(%arg0: i32, %arg1: memref<16x1xi32, #tpu.memory_space<vmem>>, %arg2: memref<64x128xf32, #tpu.memory_space<vmem>>, %arg3: memref<16x128xf32, #tpu.memory_space<vmem>>, %arg4: memref<16x128xf32, #tpu.memory_space<vmem>>) attributes {dimension_semantics = [#tpu.dimension_semantics<parallel>], iteration_bounds = array<i64: 1>, scalar_prefetch = 0 : i64, scratch_operands = 1 : i64, tpu.core_type = #tpu.core_type<tc>, window_params = [{transform_indices = @transform_0, window_bounds = array<i64: 16, 1>}, {pipeline_mode = #tpu.pipeline_mode<synchronous>, transform_indices = @transform_1, window_bounds = array<i64: 64, 128>}, {transform_indices = @transform_2, window_bounds = array<i64: 16, 128>}]} {
    %c0 = arith.constant 0 : index
    %c0_0 = arith.constant 0 : index
    %0 = vector.load %arg1[%c0, %c0_0] : memref<16x1xi32, #tpu.memory_space<vmem>>, vector<16x1xi32>
    %cst = arith.constant 0.000000e+00 : f32
    %1 = vector.broadcast %cst : f32 to vector<16x128xf32>
    %c0_1 = arith.constant 0 : index
    %c0_2 = arith.constant 0 : index
    %2 = vector.load %arg4[%c0_1, %c0_2] : memref<16x128xf32, #tpu.memory_space<vmem>>, vector<16x128xf32>
    tpu.vector_store %arg4[%c0_1, %c0_2], %1 {strides = array<i32>} : memref<16x128xf32, #tpu.memory_space<vmem>>, vector<16x128xf32>,
    %c0_i32 = arith.constant 0 : i32
    %c64_i32 = arith.constant 64 : i32
    %3 = arith.muli %c0_i32, %c64_i32 : i32
    %4 = tpu.assume_multiple %3, 64 : i32
    %5 = arith.index_cast %4 : i32 to index
    %c0_3 = arith.constant 0 : index
    %6 = vector.load %arg2[%5, %c0_3] : memref<64x128xf32, #tpu.memory_space<vmem>>, vector<64x128xf32>
    %7 = tpu.iota {dimensions = array<i32: 1>} : vector<16x64xi32>
    %8 = vector.broadcast %4 : i32 to vector<16x64xi32>
    %9 = arith.addi %7, %8 : vector<16x64xi32>
    %10 = vector.broadcast %0 : vector<16x1xi32> to vector<16x64xi32>
    %11 = arith.cmpi eq, %10, %9 : vector<16x64xi32>
    %12 = arith.extui %11 : vector<16x64xi1> to vector<16x64xi32>
    %13 = arith.sitofp %12 : vector<16x64xi32> to vector<16x64xf32>
    %c0_4 = arith.constant 0 : index
    %c0_5 = arith.constant 0 : index
    %14 = vector.load %arg4[%c0_4, %c0_5] : memref<16x128xf32, #tpu.memory_space<vmem>>, vector<16x128xf32>
    %cst_6 = arith.constant dense<0.000000e+00> : vector<16x128xf32>
    %15 = tpu.matmul %13, %6, %cst_6 {dimension_numbers = #tpu.dot_dimension_numbers<[1], [0], [0], [1], [0, 0, 1, 1], [], []>} : vector<16x64xf32>, vector<64x128xf32>, vector<16x128xf32> -> vector<16x128xf32>
    %16 = arith.addf %14, %15 : vector<16x128xf32>
    %c0_7 = arith.constant 0 : index
    %c0_8 = arith.constant 0 : index
    %17 = vector.load %arg4[%c0_7, %c0_8] : memref<16x128xf32, #tpu.memory_space<vmem>>, vector<16x128xf32>
    tpu.vector_store %arg4[%c0_7, %c0_8], %16 {strides = array<i32>} : memref<16x128xf32, #tpu.memory_space<vmem>>, vector<16x128xf32>,
    %c1_i32 = arith.constant 1 : i32
    %c0_9 = arith.constant 0 : index
    %c0_10 = arith.constant 0 : index
    %18 = vector.load %arg4[%c0_9, %c0_10] : memref<16x128xf32, #tpu.memory_space<vmem>>, vector<16x128xf32>
    %cst_11 = arith.constant 11.3137083 : f32
    %19 = vector.broadcast %cst_11 : f32 to vector<16x128xf32>
    %20 = arith.mulf %18, %19 : vector<16x128xf32>
    %c0_12 = arith.constant 0 : index
    %c0_13 = arith.constant 0 : index
    %21 = vector.load %arg3[%c0_12, %c0_13] : memref<16x128xf32, #tpu.memory_space<vmem>>, vector<16x128xf32>
    tpu.vector_store %arg3[%c0_12, %c0_13], %20 {strides = array<i32>} : memref<16x128xf32, #tpu.memory_space<vmem>>, vector<16x128xf32>,
    return
  }
  func.func @transform_0(%arg0: i32) -> (i32, i32) {
    %c0_i32 = arith.constant 0 : i32
    %c0_i32_0 = arith.constant 0 : i32
    return %arg0, %c0_i32 : i32, i32
  }
  func.func @transform_1(%arg0: i32) -> (i32, i32) {
    %c0_i32 = arith.constant 0 : i32
    %c0_i32_0 = arith.constant 0 : i32
    %c0_i32_1 = arith.constant 0 : i32
    return %c0_i32, %c0_i32_0 : i32, i32
  }
  func.func @transform_2(%arg0: i32) -> (i32, i32) {
    %c0_i32 = arith.constant 0 : i32
    %c0_i32_0 = arith.constant 0 : i32
    return %arg0, %c0_i32 : i32, i32
  }
}

module attributes {stable_mosaic.version = 11 : i64} {
  func.func @_gather_kernel(%arg0: i32, %arg1: memref<16xi32, #tpu.memory_space<smem>>, %arg2: memref<64x128xf32, #tpu.memory_space<any>>, %arg3: memref<8x128xf32, #tpu.memory_space<vmem>>, %arg4: memref<8x128xf32, #tpu.memory_space<vmem>>, %arg5: memref<8x!tpu.dma_semaphore, #tpu.memory_space<semaphore_mem>>) attributes {dimension_semantics = [#tpu.dimension_semantics<parallel>], iteration_bounds = array<i64: 2>, scalar_prefetch = 1 : i64, scratch_operands = 2 : i64, tpu.core_type = #tpu.core_type<tc>, window_params = [{}, {transform_indices = @transform_1, window_bounds = array<i64: 8, 128>}]} {
    %c8_i32 = arith.constant 8 : i32
    %0 = arith.muli %arg0, %c8_i32 : i32
    %c0_i32 = arith.constant 0 : i32
    %1 = arith.addi %0, %c0_i32 : i32
    %2 = arith.index_cast %1 : i32 to index
    %3 = memref.load %arg1[%2] : memref<16xi32, #tpu.memory_space<smem>>
    %c0_i32_0 = arith.constant 0 : i32
    %c0_i32_1 = arith.constant 0 : i32
    %4 = tpu.memref_slice %arg2[%3, %c0_i32_1] : memref<64x128xf32, #tpu.memory_space<any>> -> memref<1x128xf32, #tpu.memory_space<any>>
    %c0_i32_2 = arith.constant 0 : i32
    %c0_i32_3 = arith.constant 0 : i32
    %5 = tpu.memref_slice %arg4[%c0_i32_2, %c0_i32_3] : memref<8x128xf32, #tpu.memory_space<vmem>> -> memref<1x128xf32, #tpu.memory_space<vmem>>
    %6 = tpu.memref_slice %arg5[%c0_i32_0] : memref<8x!tpu.dma_semaphore, #tpu.memory_space<semaphore_mem>> -> memref<1x!tpu.dma_semaphore, #tpu.memory_space<semaphore_mem>>
    %7 = tpu.memref_squeeze %6 : memref<1x!tpu.dma_semaphore, #tpu.memory_space<semaphore_mem>> -> memref<!tpu.dma_semaphore, #tpu.memory_space<semaphore_mem>>
    tpu.enqueue_dma source(%4 : memref<1x128xf32, #tpu.memory_space<any>>) target(%5 : memref<1x128xf32, #tpu.memory_space<vmem>>) target_semaphore(%7 : memref<!tpu.dma_semaphore, #tpu.memory_space<semaphore_mem>>)
    %c1_i32 = arith.constant 1 : i32
    %8 = arith.addi %0, %c1_i32 : i32
    %9 = arith.index_cast %8 : i32 to index
    %10 = memref.load %arg1[%9] : memref<16xi32, #tpu.memory_space<smem>>
    %c1_i32_4 = arith.constant 1 : i32
    %c0_i32_5 = arith.constant 0 : i32
    %11 = tpu.memref_slice %arg2[%10, %c0_i32_5] : memref<64x128xf32, #tpu.memory_space<any>> -> memref<1x128xf32, #tpu.memory_space<any>>
    %c1_i32_6 = arith.constant 1 : i32
    %c0_i32_7 = arith.constant 0 : i32
    %12 = tpu.memref_slice %arg4[%c1_i32_6, %c0_i32_7] : memref<8x128xf32, #tpu.memory_space<vmem>> -> memref<1x128xf32, #tpu.memory_space<vmem>>
    %13 = tpu.memref_slice %arg5[%c1_i32_4] : memref<8x!tpu.dma_semaphore, #tpu.memory_space<semaphore_mem>> -> memref<1x!tpu.dma_semaphore, #tpu.memory_space<semaphore_mem>>
    %14 = tpu.memref_squeeze %13 : memref<1x!tpu.dma_semaphore, #tpu.memory_space<semaphore_mem>> -> memref<!tpu.dma_semaphore, #tpu.memory_space<semaphore_mem>>
    tpu.enqueue_dma source(%11 : memref<1x128xf32, #tpu.memory_space<any>>) target(%12 : memref<1x128xf32, #tpu.memory_space<vmem>>) target_semaphore(%14 : memref<!tpu.dma_semaphore, #tpu.memory_space<semaphore_mem>>)
    %c2_i32 = arith.constant 2 : i32
    %15 = arith.addi %0, %c2_i32 : i32
    %16 = arith.index_cast %15 : i32 to index
    %17 = memref.load %arg1[%16] : memref<16xi32, #tpu.memory_space<smem>>
    %c2_i32_8 = arith.constant 2 : i32
    %c0_i32_9 = arith.constant 0 : i32
    %18 = tpu.memref_slice %arg2[%17, %c0_i32_9] : memref<64x128xf32, #tpu.memory_space<any>> -> memref<1x128xf32, #tpu.memory_space<any>>
    %c2_i32_10 = arith.constant 2 : i32
    %c0_i32_11 = arith.constant 0 : i32
    %19 = tpu.memref_slice %arg4[%c2_i32_10, %c0_i32_11] : memref<8x128xf32, #tpu.memory_space<vmem>> -> memref<1x128xf32, #tpu.memory_space<vmem>>
    %20 = tpu.memref_slice %arg5[%c2_i32_8] : memref<8x!tpu.dma_semaphore, #tpu.memory_space<semaphore_mem>> -> memref<1x!tpu.dma_semaphore, #tpu.memory_space<semaphore_mem>>
    %21 = tpu.memref_squeeze %20 : memref<1x!tpu.dma_semaphore, #tpu.memory_space<semaphore_mem>> -> memref<!tpu.dma_semaphore, #tpu.memory_space<semaphore_mem>>
    tpu.enqueue_dma source(%18 : memref<1x128xf32, #tpu.memory_space<any>>) target(%19 : memref<1x128xf32, #tpu.memory_space<vmem>>) target_semaphore(%21 : memref<!tpu.dma_semaphore, #tpu.memory_space<semaphore_mem>>)
    %c3_i32 = arith.constant 3 : i32
    %22 = arith.addi %0, %c3_i32 : i32
    %23 = arith.index_cast %22 : i32 to index
    %24 = memref.load %arg1[%23] : memref<16xi32, #tpu.memory_space<smem>>
    %c3_i32_12 = arith.constant 3 : i32
    %c0_i32_13 = arith.constant 0 : i32
    %25 = tpu.memref_slice %arg2[%24, %c0_i32_13] : memref<64x128xf32, #tpu.memory_space<any>> -> memref<1x128xf32, #tpu.memory_space<any>>
    %c3_i32_14 = arith.constant 3 : i32
    %c0_i32_15 = arith.constant 0 : i32
    %26 = tpu.memref_slice %arg4[%c3_i32_14, %c0_i32_15] : memref<8x128xf32, #tpu.memory_space<vmem>> -> memref<1x128xf32, #tpu.memory_space<vmem>>
    %27 = tpu.memref_slice %arg5[%c3_i32_12] : memref<8x!tpu.dma_semaphore, #tpu.memory_space<semaphore_mem>> -> memref<1x!tpu.dma_semaphore, #tpu.memory_space<semaphore_mem>>
    %28 = tpu.memref_squeeze %27 : memref<1x!tpu.dma_semaphore, #tpu.memory_space<semaphore_mem>> -> memref<!tpu.dma_semaphore, #tpu.memory_space<semaphore_mem>>
    tpu.enqueue_dma source(%25 : memref<1x128xf32, #tpu.memory_space<any>>) target(%26 : memref<1x128xf32, #tpu.memory_space<vmem>>) target_semaphore(%28 : memref<!tpu.dma_semaphore, #tpu.memory_space<semaphore_mem>>)
    %c4_i32 = arith.constant 4 : i32
    %29 = arith.addi %0, %c4_i32 : i32
    %30 = arith.index_cast %29 : i32 to index
    %31 = memref.load %arg1[%30] : memref<16xi32, #tpu.memory_space<smem>>
    %c4_i32_16 = arith.constant 4 : i32
    %c0_i32_17 = arith.constant 0 : i32
    %32 = tpu.memref_slice %arg2[%31, %c0_i32_17] : memref<64x128xf32, #tpu.memory_space<any>> -> memref<1x128xf32, #tpu.memory_space<any>>
    %c4_i32_18 = arith.constant 4 : i32
    %c0_i32_19 = arith.constant 0 : i32
    %33 = tpu.memref_slice %arg4[%c4_i32_18, %c0_i32_19] : memref<8x128xf32, #tpu.memory_space<vmem>> -> memref<1x128xf32, #tpu.memory_space<vmem>>
    %34 = tpu.memref_slice %arg5[%c4_i32_16] : memref<8x!tpu.dma_semaphore, #tpu.memory_space<semaphore_mem>> -> memref<1x!tpu.dma_semaphore, #tpu.memory_space<semaphore_mem>>
    %35 = tpu.memref_squeeze %34 : memref<1x!tpu.dma_semaphore, #tpu.memory_space<semaphore_mem>> -> memref<!tpu.dma_semaphore, #tpu.memory_space<semaphore_mem>>
    tpu.enqueue_dma source(%32 : memref<1x128xf32, #tpu.memory_space<any>>) target(%33 : memref<1x128xf32, #tpu.memory_space<vmem>>) target_semaphore(%35 : memref<!tpu.dma_semaphore, #tpu.memory_space<semaphore_mem>>)
    %c5_i32 = arith.constant 5 : i32
    %36 = arith.addi %0, %c5_i32 : i32
    %37 = arith.index_cast %36 : i32 to index
    %38 = memref.load %arg1[%37] : memref<16xi32, #tpu.memory_space<smem>>
    %c5_i32_20 = arith.constant 5 : i32
    %c0_i32_21 = arith.constant 0 : i32
    %39 = tpu.memref_slice %arg2[%38, %c0_i32_21] : memref<64x128xf32, #tpu.memory_space<any>> -> memref<1x128xf32, #tpu.memory_space<any>>
    %c5_i32_22 = arith.constant 5 : i32
    %c0_i32_23 = arith.constant 0 : i32
    %40 = tpu.memref_slice %arg4[%c5_i32_22, %c0_i32_23] : memref<8x128xf32, #tpu.memory_space<vmem>> -> memref<1x128xf32, #tpu.memory_space<vmem>>
    %41 = tpu.memref_slice %arg5[%c5_i32_20] : memref<8x!tpu.dma_semaphore, #tpu.memory_space<semaphore_mem>> -> memref<1x!tpu.dma_semaphore, #tpu.memory_space<semaphore_mem>>
    %42 = tpu.memref_squeeze %41 : memref<1x!tpu.dma_semaphore, #tpu.memory_space<semaphore_mem>> -> memref<!tpu.dma_semaphore, #tpu.memory_space<semaphore_mem>>
    tpu.enqueue_dma source(%39 : memref<1x128xf32, #tpu.memory_space<any>>) target(%40 : memref<1x128xf32, #tpu.memory_space<vmem>>) target_semaphore(%42 : memref<!tpu.dma_semaphore, #tpu.memory_space<semaphore_mem>>)
    %c6_i32 = arith.constant 6 : i32
    %43 = arith.addi %0, %c6_i32 : i32
    %44 = arith.index_cast %43 : i32 to index
    %45 = memref.load %arg1[%44] : memref<16xi32, #tpu.memory_space<smem>>
    %c6_i32_24 = arith.constant 6 : i32
    %c0_i32_25 = arith.constant 0 : i32
    %46 = tpu.memref_slice %arg2[%45, %c0_i32_25] : memref<64x128xf32, #tpu.memory_space<any>> -> memref<1x128xf32, #tpu.memory_space<any>>
    %c6_i32_26 = arith.constant 6 : i32
    %c0_i32_27 = arith.constant 0 : i32
    %47 = tpu.memref_slice %arg4[%c6_i32_26, %c0_i32_27] : memref<8x128xf32, #tpu.memory_space<vmem>> -> memref<1x128xf32, #tpu.memory_space<vmem>>
    %48 = tpu.memref_slice %arg5[%c6_i32_24] : memref<8x!tpu.dma_semaphore, #tpu.memory_space<semaphore_mem>> -> memref<1x!tpu.dma_semaphore, #tpu.memory_space<semaphore_mem>>
    %49 = tpu.memref_squeeze %48 : memref<1x!tpu.dma_semaphore, #tpu.memory_space<semaphore_mem>> -> memref<!tpu.dma_semaphore, #tpu.memory_space<semaphore_mem>>
    tpu.enqueue_dma source(%46 : memref<1x128xf32, #tpu.memory_space<any>>) target(%47 : memref<1x128xf32, #tpu.memory_space<vmem>>) target_semaphore(%49 : memref<!tpu.dma_semaphore, #tpu.memory_space<semaphore_mem>>)
    %c7_i32 = arith.constant 7 : i32
    %50 = arith.addi %0, %c7_i32 : i32
    %51 = arith.index_cast %50 : i32 to index
    %52 = memref.load %arg1[%51] : memref<16xi32, #tpu.memory_space<smem>>
    %c7_i32_28 = arith.constant 7 : i32
    %c0_i32_29 = arith.constant 0 : i32
    %53 = tpu.memref_slice %arg2[%52, %c0_i32_29] : memref<64x128xf32, #tpu.memory_space<any>> -> memref<1x128xf32, #tpu.memory_space<any>>
    %c7_i32_30 = arith.constant 7 : i32
    %c0_i32_31 = arith.constant 0 : i32
    %54 = tpu.memref_slice %arg4[%c7_i32_30, %c0_i32_31] : memref<8x128xf32, #tpu.memory_space<vmem>> -> memref<1x128xf32, #tpu.memory_space<vmem>>
    %55 = tpu.memref_slice %arg5[%c7_i32_28] : memref<8x!tpu.dma_semaphore, #tpu.memory_space<semaphore_mem>> -> memref<1x!tpu.dma_semaphore, #tpu.memory_space<semaphore_mem>>
    %56 = tpu.memref_squeeze %55 : memref<1x!tpu.dma_semaphore, #tpu.memory_space<semaphore_mem>> -> memref<!tpu.dma_semaphore, #tpu.memory_space<semaphore_mem>>
    tpu.enqueue_dma source(%53 : memref<1x128xf32, #tpu.memory_space<any>>) target(%54 : memref<1x128xf32, #tpu.memory_space<vmem>>) target_semaphore(%56 : memref<!tpu.dma_semaphore, #tpu.memory_space<semaphore_mem>>)
    %c0_i32_32 = arith.constant 0 : i32
    %c0_i32_33 = arith.constant 0 : i32
    %57 = tpu.memref_slice %arg2[%3, %c0_i32_33] : memref<64x128xf32, #tpu.memory_space<any>> -> memref<1x128xf32, #tpu.memory_space<any>>
    %c0_i32_34 = arith.constant 0 : i32
    %c0_i32_35 = arith.constant 0 : i32
    %58 = tpu.memref_slice %arg4[%c0_i32_34, %c0_i32_35] : memref<8x128xf32, #tpu.memory_space<vmem>> -> memref<1x128xf32, #tpu.memory_space<vmem>>
    %59 = tpu.memref_slice %arg5[%c0_i32_32] : memref<8x!tpu.dma_semaphore, #tpu.memory_space<semaphore_mem>> -> memref<1x!tpu.dma_semaphore, #tpu.memory_space<semaphore_mem>>
    %60 = tpu.memref_squeeze %59 : memref<1x!tpu.dma_semaphore, #tpu.memory_space<semaphore_mem>> -> memref<!tpu.dma_semaphore, #tpu.memory_space<semaphore_mem>>
    tpu.wait_dma2 semaphore(%60 : memref<!tpu.dma_semaphore, #tpu.memory_space<semaphore_mem>>) src(%57 : memref<1x128xf32, #tpu.memory_space<any>>) dst(%58 : memref<1x128xf32, #tpu.memory_space<vmem>>)
    %c1_i32_36 = arith.constant 1 : i32
    %c0_i32_37 = arith.constant 0 : i32
    %61 = tpu.memref_slice %arg2[%10, %c0_i32_37] : memref<64x128xf32, #tpu.memory_space<any>> -> memref<1x128xf32, #tpu.memory_space<any>>
    %c1_i32_38 = arith.constant 1 : i32
    %c0_i32_39 = arith.constant 0 : i32
    %62 = tpu.memref_slice %arg4[%c1_i32_38, %c0_i32_39] : memref<8x128xf32, #tpu.memory_space<vmem>> -> memref<1x128xf32, #tpu.memory_space<vmem>>
    %63 = tpu.memref_slice %arg5[%c1_i32_36] : memref<8x!tpu.dma_semaphore, #tpu.memory_space<semaphore_mem>> -> memref<1x!tpu.dma_semaphore, #tpu.memory_space<semaphore_mem>>
    %64 = tpu.memref_squeeze %63 : memref<1x!tpu.dma_semaphore, #tpu.memory_space<semaphore_mem>> -> memref<!tpu.dma_semaphore, #tpu.memory_space<semaphore_mem>>
    tpu.wait_dma2 semaphore(%64 : memref<!tpu.dma_semaphore, #tpu.memory_space<semaphore_mem>>) src(%61 : memref<1x128xf32, #tpu.memory_space<any>>) dst(%62 : memref<1x128xf32, #tpu.memory_space<vmem>>)
    %c2_i32_40 = arith.constant 2 : i32
    %c0_i32_41 = arith.constant 0 : i32
    %65 = tpu.memref_slice %arg2[%17, %c0_i32_41] : memref<64x128xf32, #tpu.memory_space<any>> -> memref<1x128xf32, #tpu.memory_space<any>>
    %c2_i32_42 = arith.constant 2 : i32
    %c0_i32_43 = arith.constant 0 : i32
    %66 = tpu.memref_slice %arg4[%c2_i32_42, %c0_i32_43] : memref<8x128xf32, #tpu.memory_space<vmem>> -> memref<1x128xf32, #tpu.memory_space<vmem>>
    %67 = tpu.memref_slice %arg5[%c2_i32_40] : memref<8x!tpu.dma_semaphore, #tpu.memory_space<semaphore_mem>> -> memref<1x!tpu.dma_semaphore, #tpu.memory_space<semaphore_mem>>
    %68 = tpu.memref_squeeze %67 : memref<1x!tpu.dma_semaphore, #tpu.memory_space<semaphore_mem>> -> memref<!tpu.dma_semaphore, #tpu.memory_space<semaphore_mem>>
    tpu.wait_dma2 semaphore(%68 : memref<!tpu.dma_semaphore, #tpu.memory_space<semaphore_mem>>) src(%65 : memref<1x128xf32, #tpu.memory_space<any>>) dst(%66 : memref<1x128xf32, #tpu.memory_space<vmem>>)
    %c3_i32_44 = arith.constant 3 : i32
    %c0_i32_45 = arith.constant 0 : i32
    %69 = tpu.memref_slice %arg2[%24, %c0_i32_45] : memref<64x128xf32, #tpu.memory_space<any>> -> memref<1x128xf32, #tpu.memory_space<any>>
    %c3_i32_46 = arith.constant 3 : i32
    %c0_i32_47 = arith.constant 0 : i32
    %70 = tpu.memref_slice %arg4[%c3_i32_46, %c0_i32_47] : memref<8x128xf32, #tpu.memory_space<vmem>> -> memref<1x128xf32, #tpu.memory_space<vmem>>
    %71 = tpu.memref_slice %arg5[%c3_i32_44] : memref<8x!tpu.dma_semaphore, #tpu.memory_space<semaphore_mem>> -> memref<1x!tpu.dma_semaphore, #tpu.memory_space<semaphore_mem>>
    %72 = tpu.memref_squeeze %71 : memref<1x!tpu.dma_semaphore, #tpu.memory_space<semaphore_mem>> -> memref<!tpu.dma_semaphore, #tpu.memory_space<semaphore_mem>>
    tpu.wait_dma2 semaphore(%72 : memref<!tpu.dma_semaphore, #tpu.memory_space<semaphore_mem>>) src(%69 : memref<1x128xf32, #tpu.memory_space<any>>) dst(%70 : memref<1x128xf32, #tpu.memory_space<vmem>>)
    %c4_i32_48 = arith.constant 4 : i32
    %c0_i32_49 = arith.constant 0 : i32
    %73 = tpu.memref_slice %arg2[%31, %c0_i32_49] : memref<64x128xf32, #tpu.memory_space<any>> -> memref<1x128xf32, #tpu.memory_space<any>>
    %c4_i32_50 = arith.constant 4 : i32
    %c0_i32_51 = arith.constant 0 : i32
    %74 = tpu.memref_slice %arg4[%c4_i32_50, %c0_i32_51] : memref<8x128xf32, #tpu.memory_space<vmem>> -> memref<1x128xf32, #tpu.memory_space<vmem>>
    %75 = tpu.memref_slice %arg5[%c4_i32_48] : memref<8x!tpu.dma_semaphore, #tpu.memory_space<semaphore_mem>> -> memref<1x!tpu.dma_semaphore, #tpu.memory_space<semaphore_mem>>
    %76 = tpu.memref_squeeze %75 : memref<1x!tpu.dma_semaphore, #tpu.memory_space<semaphore_mem>> -> memref<!tpu.dma_semaphore, #tpu.memory_space<semaphore_mem>>
    tpu.wait_dma2 semaphore(%76 : memref<!tpu.dma_semaphore, #tpu.memory_space<semaphore_mem>>) src(%73 : memref<1x128xf32, #tpu.memory_space<any>>) dst(%74 : memref<1x128xf32, #tpu.memory_space<vmem>>)
    %c5_i32_52 = arith.constant 5 : i32
    %c0_i32_53 = arith.constant 0 : i32
    %77 = tpu.memref_slice %arg2[%38, %c0_i32_53] : memref<64x128xf32, #tpu.memory_space<any>> -> memref<1x128xf32, #tpu.memory_space<any>>
    %c5_i32_54 = arith.constant 5 : i32
    %c0_i32_55 = arith.constant 0 : i32
    %78 = tpu.memref_slice %arg4[%c5_i32_54, %c0_i32_55] : memref<8x128xf32, #tpu.memory_space<vmem>> -> memref<1x128xf32, #tpu.memory_space<vmem>>
    %79 = tpu.memref_slice %arg5[%c5_i32_52] : memref<8x!tpu.dma_semaphore, #tpu.memory_space<semaphore_mem>> -> memref<1x!tpu.dma_semaphore, #tpu.memory_space<semaphore_mem>>
    %80 = tpu.memref_squeeze %79 : memref<1x!tpu.dma_semaphore, #tpu.memory_space<semaphore_mem>> -> memref<!tpu.dma_semaphore, #tpu.memory_space<semaphore_mem>>
    tpu.wait_dma2 semaphore(%80 : memref<!tpu.dma_semaphore, #tpu.memory_space<semaphore_mem>>) src(%77 : memref<1x128xf32, #tpu.memory_space<any>>) dst(%78 : memref<1x128xf32, #tpu.memory_space<vmem>>)
    %c6_i32_56 = arith.constant 6 : i32
    %c0_i32_57 = arith.constant 0 : i32
    %81 = tpu.memref_slice %arg2[%45, %c0_i32_57] : memref<64x128xf32, #tpu.memory_space<any>> -> memref<1x128xf32, #tpu.memory_space<any>>
    %c6_i32_58 = arith.constant 6 : i32
    %c0_i32_59 = arith.constant 0 : i32
    %82 = tpu.memref_slice %arg4[%c6_i32_58, %c0_i32_59] : memref<8x128xf32, #tpu.memory_space<vmem>> -> memref<1x128xf32, #tpu.memory_space<vmem>>
    %83 = tpu.memref_slice %arg5[%c6_i32_56] : memref<8x!tpu.dma_semaphore, #tpu.memory_space<semaphore_mem>> -> memref<1x!tpu.dma_semaphore, #tpu.memory_space<semaphore_mem>>
    %84 = tpu.memref_squeeze %83 : memref<1x!tpu.dma_semaphore, #tpu.memory_space<semaphore_mem>> -> memref<!tpu.dma_semaphore, #tpu.memory_space<semaphore_mem>>
    tpu.wait_dma2 semaphore(%84 : memref<!tpu.dma_semaphore, #tpu.memory_space<semaphore_mem>>) src(%81 : memref<1x128xf32, #tpu.memory_space<any>>) dst(%82 : memref<1x128xf32, #tpu.memory_space<vmem>>)
    %c7_i32_60 = arith.constant 7 : i32
    %c0_i32_61 = arith.constant 0 : i32
    %85 = tpu.memref_slice %arg2[%52, %c0_i32_61] : memref<64x128xf32, #tpu.memory_space<any>> -> memref<1x128xf32, #tpu.memory_space<any>>
    %c7_i32_62 = arith.constant 7 : i32
    %c0_i32_63 = arith.constant 0 : i32
    %86 = tpu.memref_slice %arg4[%c7_i32_62, %c0_i32_63] : memref<8x128xf32, #tpu.memory_space<vmem>> -> memref<1x128xf32, #tpu.memory_space<vmem>>
    %87 = tpu.memref_slice %arg5[%c7_i32_60] : memref<8x!tpu.dma_semaphore, #tpu.memory_space<semaphore_mem>> -> memref<1x!tpu.dma_semaphore, #tpu.memory_space<semaphore_mem>>
    %88 = tpu.memref_squeeze %87 : memref<1x!tpu.dma_semaphore, #tpu.memory_space<semaphore_mem>> -> memref<!tpu.dma_semaphore, #tpu.memory_space<semaphore_mem>>
    tpu.wait_dma2 semaphore(%88 : memref<!tpu.dma_semaphore, #tpu.memory_space<semaphore_mem>>) src(%85 : memref<1x128xf32, #tpu.memory_space<any>>) dst(%86 : memref<1x128xf32, #tpu.memory_space<vmem>>)
    %c0 = arith.constant 0 : index
    %c0_64 = arith.constant 0 : index
    %89 = vector.load %arg4[%c0, %c0_64] : memref<8x128xf32, #tpu.memory_space<vmem>>, vector<8x128xf32>
    %cst = arith.constant 11.3137083 : f32
    %90 = vector.broadcast %cst : f32 to vector<8x128xf32>
    %91 = arith.mulf %89, %90 : vector<8x128xf32>
    %c0_65 = arith.constant 0 : index
    %c0_66 = arith.constant 0 : index
    %92 = vector.load %arg3[%c0_65, %c0_66] : memref<8x128xf32, #tpu.memory_space<vmem>>, vector<8x128xf32>
    tpu.vector_store %arg3[%c0_65, %c0_66], %91 {strides = array<i32>} : memref<8x128xf32, #tpu.memory_space<vmem>>, vector<8x128xf32>,
    return
  }
  func.func @transform_1(%arg0: i32, %arg1: memref<16xi32, #tpu.memory_space<smem>>) -> (i32, i32) {
    %c0_i32 = arith.constant 0 : i32
    %c0_i32_0 = arith.constant 0 : i32
    return %arg0, %c0_i32 : i32, i32
  }
}

</mosaic_0001>

<llo_original>
// kernel: tpu_custom_call.1
$region0: #{tpu_custom_call.1}
  #allocation0 [shape = 'u32[]', space=smem, size = 0x4, offset = 0x4, fixed_abs, tag = 'smem constant byte address 0x4 - core index']
  #allocation1 [shape = 'u32[144,128]{1,0:T(1,128)}', space=vmem, size = 0x12000, scoped, tag = 'internal scratch']
  #allocation2 [shape = 'f32[16,128]{1,0:T(8,128)}', space=vmem, size = 0x2000, scoped, tag = 'scratch operand']
  %s0 = inlined_call_operand.vmem [shape: s32[16,1], index: 0, kind: input, shape index: {}]
  %s1 = inlined_call_operand.hbm [shape: f32[64,128], index: 1, kind: input, shape index: {}]
  %s2 = inlined_call_operand.hbm [shape: f32[16,128], index: 2, kind: output, shape index: {}]
  %s3 = sld [smem:[#allocation0]]
  $region22: #{tpu_custom_call.1} parent=0
    _
  %s5 = ssub.s32 1, %s3
  %s6 = scalar_select 0, %s5, %s3
  $region1: #{tpu_custom_call.1} parent=0
    #allocation3 [shape = 'u8[32768]{0}', space=vmem, size = 0x8000, scoped, tag = 'input window, operand 1, single buffered']
    #allocation4 [shape = 's32[1]{0}', space=sflag, size = 0x4, scoped, tag = 'scoped memory for tpu_custom_call.1']
    #allocation5 [shape = 's32[1]{0}', space=sflag, size = 0x4, scoped, tag = 'scoped memory for tpu_custom_call.1']
    #allocation6 [shape = 'u8[8192]{0}', space=vmem, size = 0x2000, scoped, tag = 'output window, operand 0, single buffered']
    %7 = vsyncpa [#allocation4], 0
    %8 = vsyncpa [#allocation5], 0
    // Predicated region
    $region2: #{tpu_custom_call.1} parent=1 // pred_check
      _
    $region3: #{tpu_custom_call.1} parent=1 // pred_check_branch
      %10 = sbr.rel (0) target = $region5
    $region4: #{tpu_custom_call.1} parent=1 // pred_region
      _
    $region5: #{tpu_custom_call.1} parent=1 // pred_fallthru
      _
    // Predicated region
    $region6: #{tpu_custom_call.1} parent=1 // pred_check
      _
    $region7: #{tpu_custom_call.1} parent=1 // pred_check_branch
      %12 = sbr.rel (0) target = $region9
    $region8: #{tpu_custom_call.1} parent=1 // pred_region
      %s14 = ssub.s32 1024, 1024
      %15 = vsyncadd [#allocation4], %s14
      %s16 = sshll.u32 [#allocation3], 4
      %s17 = int_to_ptr.vmem [resolvable:$true] %s16
      %22 = dma.hbm_to_vmem [thread:$0]  %s1, 1024, %s17, [#allocation4], 128, 128, 8
    $region9: #{tpu_custom_call.1} parent=1 // pred_fallthru
      _
    // Predicated region
    $region10: #{tpu_custom_call.1} parent=1 // pred_check
      _
    $region11: #{tpu_custom_call.1} parent=1 // pred_check_branch
      %24 = sbr.rel (0) target = $region13
    $region12: #{tpu_custom_call.1} parent=1 // pred_region
      %25 = dma.done [#allocation4], 1024
    $region13: #{tpu_custom_call.1} parent=1 // pred_fallthru
      _
    %v26 = vld [vmem:[%s0] sm:$0xff]
    %v27 = vld [vmem:[%s0 + $0x8] sm:$0xff]
    %28 = vst [vmem:[#allocation2] sm:$0xff] 0.0
    %29 = vst [vmem:[#allocation2 + $0x8] sm:$0xff] 0.0
    %v30 = vld [vmem:[#allocation3] sm:$0xff]
    %v31 = vld [vmem:[#allocation3 + $0x8] sm:$0xff]
    %v32 = vld [vmem:[#allocation3 + $0x10] sm:$0xff]
    %v33 = vld [vmem:[#allocation3 + $0x18] sm:$0xff]
    %v34 = vld [vmem:[#allocation3 + $0x20] sm:$0xff]
    %v35 = vld [vmem:[#allocation3 + $0x28] sm:$0xff]
    %v36 = vld [vmem:[#allocation3 + $0x30] sm:$0xff]
    %v37 = vld [vmem:[#allocation3 + $0x38] sm:$0xff]
    %v38 = vlaneseq
    %v39 = vand.u32 %v38, 127
    %v40 = vstv 0
    %v41 = vadd.s32 %v39, %v40
    %42 = vset.pattern.permute.xlu0 0
    %43 = vperm.xlu0 %42, %v26
    %v44 = vpop.permute.xlu0 %43
    %45 = vset.pattern.permute.xlu0 0
    %46 = vperm.xlu0 %45, %v27
    %v47 = vpop.permute.xlu0 %46
    %vm48 = vcmp.eq.s32.totalorder %v44, %v41
    %vm49 = vcmp.eq.s32.totalorder %v47, %v41
    %v50 = vsel %vm48, 1, 0
    %v51 = vsel %vm49, 1, 0
    %v52 = vcvt.s32.f32 %v50
    %v53 = vcvt.s32.f32 %v51
    %v54 = vld [vmem:[#allocation2] sm:$0xff]
    %v55 = vld [vmem:[#allocation2 + $0x8] sm:$0xff]
    %vm56 = vcmask 523264
    %v58 = vsel %vm56, %v52, 0
    %v61 = vsel %vm56, %v53, 0
    %63 = vmatprep.subr.mxu0 0.0
    %64 = vmatpush1.msra.mxu0 %v30
    %65 = vmatprep.subr.mxu0 0.0
    %66 = vmatpush1.msra.mxu0 %v31
    %67 = vmatprep.subr.mxu0 0.0
    %68 = vmatpush1.msra.mxu0 %v32
    %69 = vmatprep.subr.mxu0 0.0
    %70 = vmatpush1.msra.mxu0 %v33
    %71 = vmatprep.subr.mxu0 0.0
    %72 = vmatpush1.msra.mxu0 %v34
    %73 = vmatprep.subr.mxu0 0.0
    %74 = vmatpush1.msra.mxu0 %v35
    %75 = vmatprep.subr.mxu0 0.0
    %76 = vmatpush1.msra.mxu0 %v36
    %77 = vmatprep.subr.mxu0 0.0
    %78 = vmatpush1.msra.mxu0 %v37
    %79 = vmatprep.subr.mxu0 0.0
    %80 = vmatpush1.msra.mxu0 0.0
    %81 = vmatprep.subr.mxu0 0.0
    %82 = vmatpush1.msra.mxu0 0.0
    %83 = vmatprep.subr.mxu0 0.0
    %84 = vmatpush1.msra.mxu0 0.0
    %85 = vmatprep.subr.mxu0 0.0
    %86 = vmatpush1.msra.mxu0 0.0
    %87 = vmatprep.subr.mxu0 0.0
    %88 = vmatpush1.msra.mxu0 0.0
    %89 = vmatprep.subr.mxu0 0.0
    %90 = vmatpush1.msra.mxu0 0.0
    %91 = vmatprep.subr.mxu0 0.0
    %92 = vmatpush1.msra.mxu0 0.0
    %93 = vmatprep.subr.mxu0 0.0
    %94 = vmatpush1.msra.mxu0 0.0
    %95 = vmatprep.subr.mxu0 0.0
    %96 = vmatpush1.msra.mxu0 0.0
    %97 = vmatprep.subr.mxu0 0.0
    %98 = vmatpush1.msra.mxu0 0.0
    %99 = vmatprep.subr.mxu0 0.0
    %100 = vmatpush1.msra.mxu0 0.0
    %101 = vmatprep.subr.mxu0 0.0
    %102 = vmatpush1.msra.mxu0 0.0
    %103 = vmatprep.subr.mxu0 0.0
    %104 = vmatpush1.msra.mxu0 0.0
    %105 = vmatprep.subr.mxu0 0.0
    %106 = vmatpush1.msra.mxu0 0.0
    %107 = vmatprep.subr.mxu0 0.0
    %108 = vmatpush1.msra.mxu0 0.0
    %109 = vmatprep.subr.mxu0 0.0
    %110 = vmatpush1.msra.mxu0 0.0
    %111 = vmatprep.subr.mxu0 0.0
    %112 = vmatpush1.msra.mxu0 0.0
    %113 = vmatprep.subr.mxu0 0.0
    %114 = vmatpush1.msra.mxu0 0.0
    %115 = vmatprep.subr.mxu0 0.0
    %116 = vmatpush1.msra.mxu0 0.0
    %117 = vmatprep.subr.mxu0 0.0
    %118 = vmatpush1.msra.mxu0 0.0
    %119 = vmatprep.subr.mxu0 0.0
    %120 = vmatpush1.msra.mxu0 0.0
    %121 = vmatprep.subr.mxu0 0.0
    %122 = vmatpush1.msra.mxu0 0.0
    %123 = vmatprep.subr.mxu0 0.0
    %124 = vmatpush1.msra.mxu0 0.0
    %125 = vmatprep.subr.mxu0 0.0
    %126 = vmatpush1.msra.mxu0 0.0
    %127 = vmatprep.mubr.f32.mxu0 0.0
    %128 = vmatmul.mubr.f32.gmra.mrb[0].mxu0 %v58
    %v129 = vpop.f32.mrb[0].mxu0
    %v130 = vadd.f32 0.0, %v129
    %v131 = vpop.f32.mrb[0].mxu0
    %132 = vmatprep.mubr.f32.mxu0 0.0
    %133 = vmatmul.mubr.f32.gmra.mrb[0].mxu0 %v61
    %v134 = vpop.f32.mrb[0].mxu0
    %v135 = vadd.f32 0.0, %v134
    %v136 = vpop.f32.mrb[0].mxu0
    %137 = vdwg.mxu0
    %v138 = vadd.f32 %v54, %v130
    %v139 = vadd.f32 %v55, %v135
    %140 = vst [vmem:[#allocation2] sm:$0xff] %v138
    %141 = vst [vmem:[#allocation2 + $0x8] sm:$0xff] %v139
    %v142 = vld [vmem:[#allocation2] sm:$0xff]
    %v143 = vld [vmem:[#allocation2 + $0x8] sm:$0xff]
    %v144 = vmul.f32 %v142, 11.313708
    %v145 = vmul.f32 %v143, 11.313708
    %146 = vst [vmem:[#allocation6] sm:$0xff] %v144
    %147 = vst [vmem:[#allocation6 + $0x8] sm:$0xff] %v145
    // Predicated region
    $region14: #{tpu_custom_call.1} parent=1 // pred_check
      _
    $region15: #{tpu_custom_call.1} parent=1 // pred_check_branch
      %149 = sbr.rel (0) target = $region17
    $region16: #{tpu_custom_call.1} parent=1 // pred_region
      %s151 = ssub.s32 256, 256
      %152 = vsyncadd [#allocation5], %s151
      %s153 = sshll.u32 [#allocation6], 4
      %s154 = int_to_ptr.vmem [resolvable:$true] %s153
      %159 = dma.vmem_to_hbm [thread:$0]  %s154, 256, %s2, [#allocation5], 128, 128, 8
    $region17: #{tpu_custom_call.1} parent=1 // pred_fallthru
      _
    // Predicated region
    $region18: #{tpu_custom_call.1} parent=1 // pred_check
      _
    $region19: #{tpu_custom_call.1} parent=1 // pred_check_branch
      %161 = sbr.rel (0) target = $region21
    $region20: #{tpu_custom_call.1} parent=1 // pred_region
      %162 = dma.done [#allocation5], 256
    $region21: #{tpu_custom_call.1} parent=1 // pred_fallthru
      _
    %163 = vsyncpa [#allocation4], 1
    %164 = vsyncpa [#allocation5], 1

// kernel: tpu_custom_call.1
$region0: #{tpu_custom_call.1}
  #allocation0 [shape = 'u32[]', space=smem, size = 0x4, offset = 0x4, fixed_abs, tag = 'smem constant byte address 0x4 - core index']
  #allocation1 [shape = 'u32[144,128]{1,0:T(1,128)}', space=vmem, size = 0x12000, scoped, tag = 'internal scratch']
  #allocation2 [shape = 'f32[16,128]{1,0:T(8,128)}', space=vmem, size = 0x2000, scoped, tag = 'scratch operand']
  %s0 = inlined_call_operand.vmem [shape: s32[16,1], index: 0, kind: input, shape index: {}]
  %s1 = inlined_call_operand.hbm [shape: f32[64,128], index: 1, kind: input, shape index: {}]
  %s2 = inlined_call_operand.hbm [shape: f32[16,128], index: 2, kind: output, shape index: {}]
  %s3 = sld [smem:[#allocation0]]
  $region22: #{tpu_custom_call.1} parent=0
    _
  %s5 = ssub.s32 1, %s3
  %s6 = scalar_select 0, %s5, %s3
  $region1: #{tpu_custom_call.1} parent=0
    #allocation3 [shape = 'u8[32768]{0}', space=vmem, size = 0x8000, scoped, tag = 'input window, operand 1, single buffered']
    #allocation4 [shape = 's32[1]{0}', space=sflag, size = 0x4, scoped, tag = 'scoped memory for tpu_custom_call.1']
    #allocation5 [shape = 's32[1]{0}', space=sflag, size = 0x4, scoped, tag = 'scoped memory for tpu_custom_call.1']
    #allocation6 [shape = 'u8[8192]{0}', space=vmem, size = 0x2000, scoped, tag = 'output window, operand 0, single buffered']
    %7 = vsyncpa [#allocation4], 0
    %8 = vsyncpa [#allocation5], 0
    // Predicated region
    $region2: #{tpu_custom_call.1} parent=1 // pred_check
      _
    $region3: #{tpu_custom_call.1} parent=1 // pred_check_branch
      %10 = sbr.rel (0) target = $region5
    $region4: #{tpu_custom_call.1} parent=1 // pred_region
      _
    $region5: #{tpu_custom_call.1} parent=1 // pred_fallthru
      _
    // Predicated region
    $region6: #{tpu_custom_call.1} parent=1 // pred_check
      _
    $region7: #{tpu_custom_call.1} parent=1 // pred_check_branch
      %12 = sbr.rel (0) target = $region9
    $region8: #{tpu_custom_call.1} parent=1 // pred_region
      %s14 = ssub.s32 1024, 1024
      %15 = vsyncadd [#allocation4], %s14
      %s16 = sshll.u32 [#allocation3], 4
      %s17 = int_to_ptr.vmem [resolvable:$true] %s16
      %22 = dma.hbm_to_vmem [thread:$0]  %s1, 1024, %s17, [#allocation4], 128, 128, 8
    $region9: #{tpu_custom_call.1} parent=1 // pred_fallthru
      _
    // Predicated region
    $region10: #{tpu_custom_call.1} parent=1 // pred_check
      _
    $region11: #{tpu_custom_call.1} parent=1 // pred_check_branch
      %24 = sbr.rel (0) target = $region13
    $region12: #{tpu_custom_call.1} parent=1 // pred_region
      %25 = dma.done [#allocation4], 1024
    $region13: #{tpu_custom_call.1} parent=1 // pred_fallthru
      _
    %v26 = vld [vmem:[%s0] sm:$0xff]
    %v27 = vld [vmem:[%s0 + $0x8] sm:$0xff]
    %28 = vst [vmem:[#allocation2] sm:$0xff] 0.0
    %29 = vst [vmem:[#allocation2 + $0x8] sm:$0xff] 0.0
    %v30 = vld [vmem:[#allocation3] sm:$0xff]
    %v31 = vld [vmem:[#allocation3 + $0x8] sm:$0xff]
    %v32 = vld [vmem:[#allocation3 + $0x10] sm:$0xff]
    %v33 = vld [vmem:[#allocation3 + $0x18] sm:$0xff]
    %v34 = vld [vmem:[#allocation3 + $0x20] sm:$0xff]
    %v35 = vld [vmem:[#allocation3 + $0x28] sm:$0xff]
    %v36 = vld [vmem:[#allocation3 + $0x30] sm:$0xff]
    %v37 = vld [vmem:[#allocation3 + $0x38] sm:$0xff]
    %v38 = vlaneseq
    %v39 = vand.u32 %v38, 127
    %v40 = vstv 0
    %v41 = vadd.s32 %v39, %v40
    %42 = vset.pattern.permute.xlu0 0
    %43 = vperm.xlu0 %42, %v26
    %v44 = vpop.permute.xlu0 %43
    %45 = vset.pattern.permute.xlu0 0
    %46 = vperm.xlu0 %45, %v27
    %v47 = vpop.permute.xlu0 %46
    %vm48 = vcmp.eq.s32.totalorder %v44, %v41
    %vm49 = vcmp.eq.s32.totalorder %v47, %v41
    %v50 = vsel %vm48, 1, 0
    %v51 = vsel %vm49, 1, 0
    %v52 = vcvt.s32.f32 %v50
    %v53 = vcvt.s32.f32 %v51
    %v54 = vld [vmem:[#allocation2] sm:$0xff]
    %v55 = vld [vmem:[#allocation2 + $0x8] sm:$0xff]
    %vm56 = vcmask 523264
    %v58 = vsel %vm56, %v52, 0
    %v61 = vsel %vm56, %v53, 0
    %63 = vmatprep.subr.mxu0 0.0
    %64 = vmatpush1.msra.mxu0 %v30
    %65 = vmatprep.subr.mxu0 0.0
    %66 = vmatpush1.msra.mxu0 %v31
    %67 = vmatprep.subr.mxu0 0.0
    %68 = vmatpush1.msra.mxu0 %v32
    %69 = vmatprep.subr.mxu0 0.0
    %70 = vmatpush1.msra.mxu0 %v33
    %71 = vmatprep.subr.mxu0 0.0
    %72 = vmatpush1.msra.mxu0 %v34
    %73 = vmatprep.subr.mxu0 0.0
    %74 = vmatpush1.msra.mxu0 %v35
    %75 = vmatprep.subr.mxu0 0.0
    %76 = vmatpush1.msra.mxu0 %v36
    %77 = vmatprep.subr.mxu0 0.0
    %78 = vmatpush1.msra.mxu0 %v37
    %79 = vmatprep.subr.mxu0 0.0
    %80 = vmatpush1.msra.mxu0 0.0
    %81 = vmatprep.subr.mxu0 0.0
    %82 = vmatpush1.msra.mxu0 0.0
    %83 = vmatprep.subr.mxu0 0.0
    %84 = vmatpush1.msra.mxu0 0.0
    %85 = vmatprep.subr.mxu0 0.0
    %86 = vmatpush1.msra.mxu0 0.0
    %87 = vmatprep.subr.mxu0 0.0
    %88 = vmatpush1.msra.mxu0 0.0
    %89 = vmatprep.subr.mxu0 0.0
    %90 = vmatpush1.msra.mxu0 0.0
    %91 = vmatprep.subr.mxu0 0.0
    %92 = vmatpush1.msra.mxu0 0.0
    %93 = vmatprep.subr.mxu0 0.0
    %94 = vmatpush1.msra.mxu0 0.0
    %95 = vmatprep.subr.mxu0 0.0
    %96 = vmatpush1.msra.mxu0 0.0
    %97 = vmatprep.subr.mxu0 0.0
    %98 = vmatpush1.msra.mxu0 0.0
    %99 = vmatprep.subr.mxu0 0.0
    %100 = vmatpush1.msra.mxu0 0.0
    %101 = vmatprep.subr.mxu0 0.0
    %102 = vmatpush1.msra.mxu0 0.0
    %103 = vmatprep.subr.mxu0 0.0
    %104 = vmatpush1.msra.mxu0 0.0
    %105 = vmatprep.subr.mxu0 0.0
    %106 = vmatpush1.msra.mxu0 0.0
    %107 = vmatprep.subr.mxu0 0.0
    %108 = vmatpush1.msra.mxu0 0.0
    %109 = vmatprep.subr.mxu0 0.0
    %110 = vmatpush1.msra.mxu0 0.0
    %111 = vmatprep.subr.mxu0 0.0
    %112 = vmatpush1.msra.mxu0 0.0
    %113 = vmatprep.subr.mxu0 0.0
    %114 = vmatpush1.msra.mxu0 0.0
    %115 = vmatprep.subr.mxu0 0.0
    %116 = vmatpush1.msra.mxu0 0.0
    %117 = vmatprep.subr.mxu0 0.0
    %118 = vmatpush1.msra.mxu0 0.0
    %119 = vmatprep.subr.mxu0 0.0
    %120 = vmatpush1.msra.mxu0 0.0
    %121 = vmatprep.subr.mxu0 0.0
    %122 = vmatpush1.msra.mxu0 0.0
    %123 = vmatprep.subr.mxu0 0.0
    %124 = vmatpush1.msra.mxu0 0.0
    %125 = vmatprep.subr.mxu0 0.0
    %126 = vmatpush1.msra.mxu0 0.0
    %127 = vmatprep.mubr.f32.mxu0 0.0
    %128 = vmatmul.mubr.f32.gmra.mrb[0].mxu0 %v58
    %v129 = vpop.f32.mrb[0].mxu0
    %v130 = vadd.f32 0.0, %v129
    %v131 = vpop.f32.mrb[0].mxu0
    %132 = vmatprep.mubr.f32.mxu0 0.0
    %133 = vmatmul.mubr.f32.gmra.mrb[0].mxu0 %v61
    %v134 = vpop.f32.mrb[0].mxu0
    %v135 = vadd.f32 0.0, %v134
    %v136 = vpop.f32.mrb[0].mxu0
    %137 = vdwg.mxu0
    %v138 = vadd.f32 %v54, %v130
    %v139 = vadd.f32 %v55, %v135
    %140 = vst [vmem:[#allocation2] sm:$0xff] %v138
    %141 = vst [vmem:[#allocation2 + $0x8] sm:$0xff] %v139
    %v142 = vld [vmem:[#allocation2] sm:$0xff]
    %v143 = vld [vmem:[#allocation2 + $0x8] sm:$0xff]
    %v144 = vmul.f32 %v142, 11.313708
    %v145 = vmul.f32 %v143, 11.313708
    %146 = vst [vmem:[#allocation6] sm:$0xff] %v144
    %147 = vst [vmem:[#allocation6 + $0x8] sm:$0xff] %v145
    // Predicated region
    $region14: #{tpu_custom_call.1} parent=1 // pred_check
      _
    $region15: #{tpu_custom_call.1} parent=1 // pred_check_branch
      %149 = sbr.rel (0) target = $region17
    $region16: #{tpu_custom_call.1} parent=1 // pred_region
      %s151 = ssub.s32 256, 256
      %152 = vsyncadd [#allocation5], %s151
      %s153 = sshll.u32 [#allocation6], 4
      %s154 = int_to_ptr.vmem [resolvable:$true] %s153
      %159 = dma.vmem_to_hbm [thread:$0]  %s154, 256, %s2, [#allocation5], 128, 128, 8
    $region17: #{tpu_custom_call.1} parent=1 // pred_fallthru
      _
    // Predicated region
    $region18: #{tpu_custom_call.1} parent=1 // pred_check
      _
    $region19: #{tpu_custom_call.1} parent=1 // pred_check_branch
      %161 = sbr.rel (0) target = $region21
    $region20: #{tpu_custom_call.1} parent=1 // pred_region
      %162 = dma.done [#allocation5], 256
    $region21: #{tpu_custom_call.1} parent=1 // pred_fallthru
      _
    %163 = vsyncpa [#allocation4], 1
    %164 = vsyncpa [#allocation5], 1

// kernel: tpu_custom_call.1
$region0: #{tpu_custom_call.1}
  #allocation0 [shape = 'u32[]', space=smem, size = 0x4, offset = 0x4, fixed_abs, tag = 'smem constant byte address 0x4 - core index']
  #allocation1 [shape = 'u32[144,128]{1,0:T(1,128)}', space=vmem, size = 0x12000, scoped, tag = 'internal scratch']
  #allocation2 [shape = 'f32[8,128]{1,0:T(8,128)}', space=vmem, size = 0x1000, scoped, tag = 'scratch operand']
  #allocation3 [shape = 's32[8]{0}', space=sflag, size = 0x20, scoped, tag = 'scratch operand']
  #allocation4 [shape = 's32[1]{0}', space=sflag, size = 0x4, scoped, tag = 'scoped memory for tpu_custom_call.1']
  #allocation5 [shape = 'u8[512]{0}', space=smem, size = 0x200, scoped, tag = 'prefetched SMEM operand 0']
  #allocation8 [shape = 's32[]', space=sflag, size = 0x4, offset = 0, fixed_abs, tag = 'sflag constant byte address 0x0 - dummy sync flag']
  #allocation9 [shape = 's32[]', space=sflag, size = 0x4, offset = 0, fixed_abs, tag = 'sflag constant byte address 0x0 - dummy sync flag']
  #allocation10 [shape = 'u32[]', space=smem, size = 0x4, offset = 0x44, fixed_abs, tag = 'smem constant byte address 0x44 - assertion arg 0']
  #allocation11 [shape = 'u32[]', space=smem, size = 0x4, offset = 0x48, fixed_abs, tag = 'smem constant byte address 0x48 - assertion arg 1']
  #allocation12 [shape = 's32[]', space=sflag, size = 0x4, offset = 0, fixed_abs, tag = 'sflag constant byte address 0x0 - dummy sync flag']
  #allocation13 [shape = 's32[]', space=sflag, size = 0x4, offset = 0, fixed_abs, tag = 'sflag constant byte address 0x0 - dummy sync flag']
  #allocation14 [shape = 's32[]', space=sflag, size = 0x4, offset = 0, fixed_abs, tag = 'sflag constant byte address 0x0 - dummy sync flag']
  #allocation15 [shape = 's32[]', space=sflag, size = 0x4, offset = 0, fixed_abs, tag = 'sflag constant byte address 0x0 - dummy sync flag']
  #allocation16 [shape = 's32[]', space=sflag, size = 0x4, offset = 0, fixed_abs, tag = 'sflag constant byte address 0x0 - dummy sync flag']
  #allocation17 [shape = 's32[]', space=sflag, size = 0x4, offset = 0, fixed_abs, tag = 'sflag constant byte address 0x0 - dummy sync flag']
  #allocation18 [shape = 's32[]', space=sflag, size = 0x4, offset = 0, fixed_abs, tag = 'sflag constant byte address 0x0 - dummy sync flag']
  #allocation19 [shape = 's32[]', space=sflag, size = 0x4, offset = 0, fixed_abs, tag = 'sflag constant byte address 0x0 - dummy sync flag']
  #allocation20 [shape = 's32[]', space=sflag, size = 0x4, offset = 0, fixed_abs, tag = 'sflag constant byte address 0x0 - dummy sync flag']
  #allocation21 [shape = 's32[]', space=sflag, size = 0x4, offset = 0, fixed_abs, tag = 'sflag constant byte address 0x0 - dummy sync flag']
  #allocation22 [shape = 's32[]', space=sflag, size = 0x4, offset = 0, fixed_abs, tag = 'sflag constant byte address 0x0 - dummy sync flag']
  #allocation23 [shape = 's32[]', space=sflag, size = 0x4, offset = 0, fixed_abs, tag = 'sflag constant byte address 0x0 - dummy sync flag']
  #allocation24 [shape = 's32[]', space=sflag, size = 0x4, offset = 0, fixed_abs, tag = 'sflag constant byte address 0x0 - dummy sync flag']
  #allocation25 [shape = 's32[]', space=sflag, size = 0x4, offset = 0, fixed_abs, tag = 'sflag constant byte address 0x0 - dummy sync flag']
  %s0 = inlined_call_operand.hbm [shape: s32[16], index: 0, kind: input, shape index: {}]
  %s1 = inlined_call_operand.hbm [shape: f32[64,128], index: 1, kind: input, shape index: {}]
  %s2 = inlined_call_operand.hbm [shape: f32[16,128], index: 2, kind: output, shape index: {}]
  %s3 = sld [smem:[#allocation0]]
  $region57: #{tpu_custom_call.1} parent=0
    _
  %s5 = ssub.s32 1, %s3
  %s6 = scalar_select 0, %s5, %s3
  %8 = dma.hbm_to_smem %s0, 16, [#allocation5], [#allocation4]
  %9 = dma.done [#allocation4], 16
  %10 = sfence
  $region1: #{tpu_custom_call.1} parent=0
    #allocation6 [shape = 'u8[8192]{0}', space=vmem, size = 0x2000, scoped, tag = 'output window, operand 0']
    #allocation7 [shape = 's32[2]{0}', space=sflag, size = 0x8, scoped, tag = 'scoped memory for tpu_custom_call.1']
    %11 = vsyncpa [#allocation7], 0
    %s12 = scalar_lea.sflag [#allocation7], 1
    %13 = vsyncpa %s12, 0
    loop: start=0, step=1, limit=3
    $region2: #{tpu_custom_call.1} parent=1 // loop_pre_header
      _
    $region3: #{tpu_custom_call.1} parent=1 // loop_header
      %s15 = sphi 0, %s19
      %p16 = scmp.ge.s32.totalorder %s15, 3
      %s24 = sphi 0, %s26
      %s27 = sphi 0, %s24
      %s37 = sphi 0, %s27
    $region4: #{tpu_custom_call.1} parent=1 // loop_header_branch
      %18 = sbr.rel (%p16) target = $region8
    $region5: #{tpu_custom_call.1} parent=1 // loop_body
      %s20 = ssub.s32 %s15, 1
      %s21 = sadd.s32 %s15, 1
      %s22 = ssub.s32 %s15, %s21
      %p23 = scmp.eq.s32.totalorder %s22, 0
      %s25 = sadd.s32 %s24, 1
      %s26 = scalar_select %p23, %s24, %s25
      %p28 = pneg %p23
      %p29 = scmp.eq.s32.totalorder %s15, 1
      %p30 = por %p28, %p29
      %p31 = scmp.ne.s32.totalorder %s24, %s27
      %p32 = scmp.eq.s32.totalorder %s15, 0
      %p33 = por %p31, %p32
      %p34 = scmp.ne.s32.totalorder %s24, %s27
      %p35 = scmp.eq.s32.totalorder %s20, 1
      %p36 = por %p34, %p35
      %p38 = scmp.ne.s32.totalorder %s27, %s37
      %p39 = scmp.eq.s32.totalorder %s20, 0
      %p40 = por %p38, %p39
      %p41 = scmp.lt.s32.totalorder %s15, 2
      // Predicated region
      $region9: #{tpu_custom_call.1} parent=5 // pred_check
        %p42 = pneg %p41
      $region10: #{tpu_custom_call.1} parent=5 // pred_check_branch
        %44 = sbr.rel (%p42) target = $region12
      $region11: #{tpu_custom_call.1} parent=5 // pred_region
        %p45 = pneg %p33
        %p46 = pneg %p30
        %s47 = sand.u32 %s24, 1
        %s48 = scalar_lea.sflag [#allocation7], %s47
        %s49 = sand.u32 %s24, 1
        %s50 = smul.addr %s49, 8
        %s51 = scalar_lea.vmem [#allocation6], %s50
        %s52 = smul.u32 %s15, 8
        %s53 = sld [smem:[#allocation5 + %s52]]
        %s54 = smul.addr %s53, 16
        %s55 = scalar_lea.hbm %s1, %s54
        // Predicated region
        $region13: #{tpu_custom_call.1} parent=11 // pred_check
          _
        $region14: #{tpu_custom_call.1} parent=11 // pred_check_branch
          %57 = sbr.rel target = $region16
        $region15: #{tpu_custom_call.1} parent=11 // pred_region
          %58 = sst [smem:[#allocation10]] [#allocation9]
          %59 = sst [smem:[#allocation11]] [#allocation8]
        $region16: #{tpu_custom_call.1} parent=11 // pred_fallthru
          _
        %61 = shalt.err (0)
        %s63 = sshll.u32 [#allocation2], 4
        %s64 = int_to_ptr.vmem [resolvable:$true] %s63
        %66 = dma.hbm_to_vmem [thread:$0]  %s55, 16, %s64, [#allocation3]
        %s67 = sadd.s32 %s52, 1
        %s68 = sld [smem:[#allocation5 + %s67]]
        %s69 = smul.addr %s68, 16
        %s70 = scalar_lea.hbm %s1, %s69
        %s71 = scalar_lea.vmem [#allocation2], 1
        %s72 = scalar_lea.sflag [#allocation3], 1
        // Predicated region
        $region17: #{tpu_custom_call.1} parent=11 // pred_check
          _
        $region18: #{tpu_custom_call.1} parent=11 // pred_check_branch
          %74 = sbr.rel target = $region20
        $region19: #{tpu_custom_call.1} parent=11 // pred_region
          %75 = sst [smem:[#allocation10]] [#allocation13]
          %76 = sst [smem:[#allocation11]] [#allocation12]
        $region20: #{tpu_custom_call.1} parent=11 // pred_fallthru
          _
        %78 = shalt.err (0)
        %s80 = sshll.u32 %s71, 4
        %s81 = int_to_ptr.vmem [resolvable:$true] %s80
        %83 = dma.hbm_to_vmem [thread:$0]  %s70, 16, %s81, %s72
        %s84 = sadd.s32 %s52, 2
        %s85 = sld [smem:[#allocation5 + %s84]]
        %s86 = smul.addr %s85, 16
        %s87 = scalar_lea.hbm %s1, %s86
        %s88 = scalar_lea.vmem [#allocation2], 2
        %s89 = scalar_lea.sflag [#allocation3], 2
        // Predicated region
        $region21: #{tpu_custom_call.1} parent=11 // pred_check
          _
        $region22: #{tpu_custom_call.1} parent=11 // pred_check_branch
          %91 = sbr.rel target = $region24
        $region23: #{tpu_custom_call.1} parent=11 // pred_region
          %92 = sst [smem:[#allocation10]] [#allocation15]
          %93 = sst [smem:[#allocation11]] [#allocation14]
        $region24: #{tpu_custom_call.1} parent=11 // pred_fallthru
          _
        %95 = shalt.err (0)
        %s97 = sshll.u32 %s88, 4
        %s98 = int_to_ptr.vmem [resolvable:$true] %s97
        %100 = dma.hbm_to_vmem [thread:$0]  %s87, 16, %s98, %s89
        %s101 = sadd.s32 %s52, 3
        %s102 = sld [smem:[#allocation5 + %s101]]
        %s103 = smul.addr %s102, 16
        %s104 = scalar_lea.hbm %s1, %s103
        %s105 = scalar_lea.vmem [#allocation2], 3
        %s106 = scalar_lea.sflag [#allocation3], 3
        // Predicated region
        $region25: #{tpu_custom_call.1} parent=11 // pred_check
          _
        $region26: #{tpu_custom_call.1} parent=11 // pred_check_branch
          %108 = sbr.rel target = $region28
        $region27: #{tpu_custom_call.1} parent=11 // pred_region
          %109 = sst [smem:[#allocation10]] [#allocation17]
          %110 = sst [smem:[#allocation11]] [#allocation16]
        $region28: #{tpu_custom_call.1} parent=11 // pred_fallthru
          _
        %112 = shalt.err (0)
        %s114 = sshll.u32 %s105, 4
        %s115 = int_to_ptr.vmem [resolvable:$true] %s114
        %117 = dma.hbm_to_vmem [thread:$0]  %s104, 16, %s115, %s106
        %s118 = sadd.s32 %s52, 4
        %s119 = sld [smem:[#allocation5 + %s118]]
        %s120 = smul.addr %s119, 16
        %s121 = scalar_lea.hbm %s1, %s120
        %s122 = scalar_lea.vmem [#allocation2], 4
        %s123 = scalar_lea.sflag [#allocation3], 4
        // Predicated region
        $region29: #{tpu_custom_call.1} parent=11 // pred_check
          _
        $region30: #{tpu_custom_call.1} parent=11 // pred_check_branch
          %125 = sbr.rel target = $region32
        $region31: #{tpu_custom_call.1} parent=11 // pred_region
          %126 = sst [smem:[#allocation10]] [#allocation19]
          %127 = sst [smem:[#allocation11]] [#allocation18]
        $region32: #{tpu_custom_call.1} parent=11 // pred_fallthru
          _
        %129 = shalt.err (0)
        %s131 = sshll.u32 %s122, 4
        %s132 = int_to_ptr.vmem [resolvable:$true] %s131
        %134 = dma.hbm_to_vmem [thread:$0]  %s121, 16, %s132, %s123
        %s135 = sadd.s32 %s52, 5
        %s136 = sld [smem:[#allocation5 + %s135]]
        %s137 = smul.addr %s136, 16
        %s138 = scalar_lea.hbm %s1, %s137
        %s139 = scalar_lea.vmem [#allocation2], 5
        %s140 = scalar_lea.sflag [#allocation3], 5
        // Predicated region
        $region33: #{tpu_custom_call.1} parent=11 // pred_check
          _
        $region34: #{tpu_custom_call.1} parent=11 // pred_check_branch
          %142 = sbr.rel target = $region36
        $region35: #{tpu_custom_call.1} parent=11 // pred_region
          %143 = sst [smem:[#allocation10]] [#allocation21]
          %144 = sst [smem:[#allocation11]] [#allocation20]
        $region36: #{tpu_custom_call.1} parent=11 // pred_fallthru
          _
        %146 = shalt.err (0)
        %s148 = sshll.u32 %s139, 4
        %s149 = int_to_ptr.vmem [resolvable:$true] %s148
        %151 = dma.hbm_to_vmem [thread:$0]  %s138, 16, %s149, %s140
        %s152 = sadd.s32 %s52, 6
        %s153 = sld [smem:[#allocation5 + %s152]]
        %s154 = smul.addr %s153, 16
        %s155 = scalar_lea.hbm %s1, %s154
        %s156 = scalar_lea.vmem [#allocation2], 6
        %s157 = scalar_lea.sflag [#allocation3], 6
        // Predicated region
        $region37: #{tpu_custom_call.1} parent=11 // pred_check
          _
        $region38: #{tpu_custom_call.1} parent=11 // pred_check_branch
          %159 = sbr.rel target = $region40
        $region39: #{tpu_custom_call.1} parent=11 // pred_region
          %160 = sst [smem:[#allocation10]] [#allocation23]
          %161 = sst [smem:[#allocation11]] [#allocation22]
        $region40: #{tpu_custom_call.1} parent=11 // pred_fallthru
          _
        %163 = shalt.err (0)
        %s165 = sshll.u32 %s156, 4
        %s166 = int_to_ptr.vmem [resolvable:$true] %s165
        %168 = dma.hbm_to_vmem [thread:$0]  %s155, 16, %s166, %s157
        %s169 = sadd.s32 %s52, 7
        %s170 = sld [smem:[#allocation5 + %s169]]
        %s171 = smul.addr %s170, 16
        %s172 = scalar_lea.hbm %s1, %s171
        %s173 = scalar_lea.vmem [#allocation2], 7
        %s174 = scalar_lea.sflag [#allocation3], 7
        // Predicated region
        $region41: #{tpu_custom_call.1} parent=11 // pred_check
          _
        $region42: #{tpu_custom_call.1} parent=11 // pred_check_branch
          %176 = sbr.rel target = $region44
        $region43: #{tpu_custom_call.1} parent=11 // pred_region
          %177 = sst [smem:[#allocation10]] [#allocation25]
          %178 = sst [smem:[#allocation11]] [#allocation24]
        $region44: #{tpu_custom_call.1} parent=11 // pred_fallthru
          _
        %180 = shalt.err (0)
        %s182 = sshll.u32 %s173, 4
        %s183 = int_to_ptr.vmem [resolvable:$true] %s182
        %185 = dma.hbm_to_vmem [thread:$0]  %s172, 16, %s183, %s174
        %s186 = smul.u32 1, 1
        %s187 = sshll.u32 %s186, 4
        %188 = dma.done [#allocation3], %s187
        %s189 = sshll.u32 %s186, 4
        %190 = dma.done %s72, %s189
        %s191 = sshll.u32 %s186, 4
        %192 = dma.done %s89, %s191
        %s193 = sshll.u32 %s186, 4
        %194 = dma.done %s106, %s193
        %s195 = sshll.u32 %s186, 4
        %196 = dma.done %s123, %s195
        %s197 = sshll.u32 %s186, 4
        %198 = dma.done %s140, %s197
        %s199 = sshll.u32 %s186, 4
        %200 = dma.done %s157, %s199
        %s201 = sshll.u32 %s186, 4
        %202 = dma.done %s174, %s201
        %v203 = vld [vmem:[#allocation2] sm:$0xff]
        %v204 = vmul.f32 %v203, 11.313708
        %205 = vst [vmem:[%s51] sm:$0xff] %v204
        %s206 = sand.u32 %s24, 1
        %s207 = scalar_lea.sflag [#allocation7], %s206
        %s208 = sand.u32 %s24, 1
        %s209 = smul.addr %s208, 8
        %s210 = scalar_lea.vmem [#allocation6], %s209
        // Predicated region
        $region45: #{tpu_custom_call.1} parent=11 // pred_check
          %p211 = pneg %p30
        $region46: #{tpu_custom_call.1} parent=11 // pred_check_branch
          %213 = sbr.rel (%p211) target = $region48
        $region47: #{tpu_custom_call.1} parent=11 // pred_region
          %s215 = ssub.s32 128, 128
          %216 = vsyncadd %s207, %s215
          %s217 = smul.addr %s15, 128
          %s218 = scalar_lea.hbm %s2, %s217
          %s220 = sshll.u32 %s210, 4
          %s221 = int_to_ptr.vmem [resolvable:$true] %s220
          %223 = dma.vmem_to_hbm [thread:$0]  %s221, 128, %s218, %s207
        $region48: #{tpu_custom_call.1} parent=11 // pred_fallthru
          _
      $region12: #{tpu_custom_call.1} parent=5 // pred_fallthru
        _
      %p224 = scmp.le.s32.totalorder 1, %s15
      // Predicated region
      $region49: #{tpu_custom_call.1} parent=5 // pred_check
        %p225 = pneg %p224
      $region50: #{tpu_custom_call.1} parent=5 // pred_check_branch
        %227 = sbr.rel (%p225) target = $region52
      $region51: #{tpu_custom_call.1} parent=5 // pred_region
        %s228 = ssub.s32 %s15, 1
        // Predicated region
        $region53: #{tpu_custom_call.1} parent=51 // pred_check
          %p229 = pneg %p36
        $region54: #{tpu_custom_call.1} parent=51 // pred_check_branch
          %231 = sbr.rel (%p229) target = $region56
        $region55: #{tpu_custom_call.1} parent=51 // pred_region
          %s232 = sand.u32 %s27, 1
          %s233 = scalar_lea.sflag [#allocation7], %s232
          %s234 = sand.u32 %s27, 1
          %s235 = smul.addr %s234, 8
          %s236 = scalar_lea.vmem [#allocation6], %s235
          %237 = dma.done %s233, 128
        $region56: #{tpu_custom_call.1} parent=51 // pred_fallthru
          _
      $region52: #{tpu_custom_call.1} parent=5 // pred_fallthru
        _
    $region6: #{tpu_custom_call.1} parent=1 // loop_footer
      %s19 = sadd.s32 1, %s15
    $region7: #{tpu_custom_call.1} parent=1 // loop_footer_branch
      %14 = sbr.rel target = $region3
    $region8: #{tpu_custom_call.1} parent=1 // loop_exit
      _
    %238 = vsyncpa [#allocation7], 1
    %s239 = scalar_lea.sflag [#allocation7], 1
    %240 = vsyncpa %s239, 1
  %241 = vsyncmov [#allocation3]
  %s242 = vpop.sfrf %241
  %p243 = scmp.eq.s32.totalorder %s242, 0
  %p244 = pneg %p243
  %246 = shalt.err (%p244)
  %s247 = scalar_lea.sflag [#allocation3], 1
  %248 = vsyncmov %s247
  %s249 = vpop.sfrf %248
  %p250 = scmp.eq.s32.totalorder %s249, 0
  %p251 = pneg %p250
  %253 = shalt.err (%p251)
  %s254 = scalar_lea.sflag [#allocation3], 2
  %255 = vsyncmov %s254
  %s256 = vpop.sfrf %255
  %p257 = scmp.eq.s32.totalorder %s256, 0
  %p258 = pneg %p257
  %260 = shalt.err (%p258)
  %s261 = scalar_lea.sflag [#allocation3], 3
  %262 = vsyncmov %s261
  %s263 = vpop.sfrf %262
  %p264 = scmp.eq.s32.totalorder %s263, 0
  %p265 = pneg %p264
  %267 = shalt.err (%p265)
  %s268 = scalar_lea.sflag [#allocation3], 4
  %269 = vsyncmov %s268
  %s270 = vpop.sfrf %269
  %p271 = scmp.eq.s32.totalorder %s270, 0
  %p272 = pneg %p271
  %274 = shalt.err (%p272)
  %s275 = scalar_lea.sflag [#allocation3], 5
  %276 = vsyncmov %s275
  %s277 = vpop.sfrf %276
  %p278 = scmp.eq.s32.totalorder %s277, 0
  %p279 = pneg %p278
  %281 = shalt.err (%p279)
  %s282 = scalar_lea.sflag [#allocation3], 6
  %283 = vsyncmov %s282
  %s284 = vpop.sfrf %283
  %p285 = scmp.eq.s32.totalorder %s284, 0
  %p286 = pneg %p285
  %288 = shalt.err (%p286)
  %s289 = scalar_lea.sflag [#allocation3], 7
  %290 = vsyncmov %s289
  %s291 = vpop.sfrf %290
  %p292 = scmp.eq.s32.totalorder %s291, 0
  %p293 = pneg %p292
  %295 = shalt.err (%p293)

</llo_original>
